<compile_context>
chip_gen: v5e
topology: v5e:2x2
jax: 0.10.0
libtpu: 0.0.40
codegen_flags: <defaults>
</compile_context>

<pallas_src>
import math
import functools

import jax
import jax.numpy as jnp
from jax.experimental import pallas as pl
from jax.experimental.pallas import tpu as pltpu

MAX_LEN = 128        # block_size in the reference module
DROPOUT_P = 0.1      # dropout in the reference module


def make_positional_table(max_len: int, d_model: int, dtype=jnp.float32):
    """Deterministic sin/cos table, identical to the PyTorch __init__ buffer (squeezed)."""
    position = jnp.arange(max_len, dtype=jnp.float32)[:, None]                      # (L, 1)
    div_term = jnp.exp(jnp.arange(0, d_model, 2, dtype=jnp.float32)
                       * (-math.log(10000.0) / d_model))                            # (D/2,)
    pe = jnp.zeros((max_len, d_model), dtype=jnp.float32)
    pe = pe.at[:, 0::2].set(jnp.sin(position * div_term))
    pe = pe.at[:, 1::2].set(jnp.cos(position * div_term))
    return pe.astype(dtype)                                                         # (L, D)


# ----------------------------- kernels ---------------------------------------


def _add_pe_kernel(x_ref, pe_ref, o_ref):
    # x_ref: (TS, B, D) tile; pe_ref: (TS, D) tile.  Broadcast over batch, hoisted
    # (single expression, no in-kernel loop → no repeated broadcast_in_dim).
    o_ref[...] = (x_ref[...] + pe_ref[...][:, None, :]).astype(o_ref.dtype)


def _add_pe_dropout_kernel(x_ref, pe_ref, bits_ref, o_ref, *, threshold: int, scale: float):
    # Inverted dropout via raw uint32 threshold compare:
    #   keep  <=>  bits >= round(p * 2^32)   (P[keep] = 1 - p)
    y = x_ref[...] + pe_ref[...][:, None, :]
    keep = bits_ref[...] >= jnp.uint32(threshold)
    y = jnp.where(keep, y * jnp.asarray(scale, y.dtype), jnp.zeros_like(y))
    o_ref[...] = y.astype(o_ref.dtype)


# ----------------------------- wrapper ----------------------------------------


def _choose_tile_s(S: int, B: int, D: int, x_itemsize: int, with_bits: bool) -> int:
    # Per-sequence-row working-set bytes: x tile + out tile (+ uint32 mask tile) + pe row.
    row_bytes = B * D * (2 * x_itemsize + (4 if with_bits else 0)) + D * 4
    budget = 6 * 1024 * 1024            # per-grid-step; ~12 MiB once double-buffered
    tile = min(S, max(1, budget // max(row_bytes, 1)))
    if tile < S:
        tile = max(8, (tile // 8) * 8)  # sublane-aligned row tiles
    return tile


def positional_encoding_forward(x, pe_table, *, p_drop: float = DROPOUT_P,
                                training: bool = True, rng_key=None):
    """x: (S, B, D);  pe_table: (max_len, D);  returns (S, B, D)."""
    S, B, D = x.shape
    pe_s = pe_table[:S].astype(x.dtype)              # (S, D) — matches pe[:x.size(0)]

    apply_dropout = bool(training) and p_drop > 0.0
    itemsize = jnp.dtype(x.dtype).itemsize
    tile_s = _choose_tile_s(S, B, D, itemsize, apply_dropout)
    grid = (pl.cdiv(S, tile_s),)

    x_spec = pl.BlockSpec((tile_s, B, D), lambda i: (i, 0, 0))
    pe_spec = pl.BlockSpec((tile_s, D), lambda i: (i, 0))
    out_spec = pl.BlockSpec((tile_s, B, D), lambda i: (i, 0, 0))

    bytes_accessed = 2 * x.size * itemsize + pe_s.size * itemsize
    if apply_dropout:
        bytes_accessed += x.size * 4                  # uint32 dropout mask stream
    cost = pl.CostEstimate(flops=2 * x.size, transcendentals=0,
                           bytes_accessed=bytes_accessed)
    cparams = pltpu.CompilerParams(dimension_semantics=("parallel",))

    if apply_dropout:
        if rng_key is None:
            rng_key = jax.random.PRNGKey(0)
        bits = jax.random.bits(rng_key, (S, B, D), dtype=jnp.uint32)
        threshold = min(int(round(p_drop * 2.0 ** 32)), 2 ** 32 - 1)
        scale = 1.0 / (1.0 - p_drop)
        kernel = functools.partial(_add_pe_dropout_kernel,
                                   threshold=threshold, scale=scale)
        return pl.pallas_call(
            kernel,
            out_shape=jax.ShapeDtypeStruct((S, B, D), x.dtype),
            grid=grid,
            in_specs=[x_spec, pe_spec,
                      pl.BlockSpec((tile_s, B, D), lambda i: (i, 0, 0))],
            out_specs=out_spec,
            compiler_params=cparams,
            cost_estimate=cost,
        )(x, pe_s, bits)

    return pl.pallas_call(
        _add_pe_kernel,
        out_shape=jax.ShapeDtypeStruct((S, B, D), x.dtype),
        grid=grid,
        in_specs=[x_spec, pe_spec],
        out_specs=out_spec,
        compiler_params=cparams,
        cost_estimate=cost,
    )(x, pe_s)


# ------------------------------- demo ------------------------------------------


if __name__ == "__main__":
    # Small shapes consistent with the module: (seq=8, batch=2, d_model=32).
    S, B, D = 8, 2, 32
    key = jax.random.PRNGKey(0)
    k_x, k_drop = jax.random.split(key)
    x = jax.random.normal(k_x, (S, B, D), dtype=jnp.float32)

    pe_table = make_positional_table(MAX_LEN, D)
    ref = x + pe_table[:S][:, None, :]

    # Eval mode (dropout = identity): exact match against reference.
    out_eval = jax.block_until_ready(
        positional_encoding_forward(x, pe_table, training=False))
    assert out_eval.shape == (S, B, D)
    assert jnp.allclose(out_eval, ref, atol=1e-6), "eval-mode mismatch vs reference"

    # Train mode: inverted dropout. Kept elements must equal (x + pe) / (1 - p);
    # some elements dropped, some kept.
    out_train = jax.block_until_ready(
        positional_encoding_forward(x, pe_table, training=True, rng_key=k_drop))
    assert out_train.shape == (S, B, D)
    scaled_ref = ref * (1.0 / (1.0 - DROPOUT_P))
    kept = out_train != 0
    assert jnp.allclose(jnp.where(kept, out_train, 0.0),
                        jnp.where(kept, scaled_ref, 0.0), atol=1e-5), \
        "train-mode kept values mismatch"
    n_zero = int(jnp.sum(~kept))
    assert 0 < n_zero < out_train.size, "dropout mask degenerate"

    print("KERNEL_OK")
</pallas_src>

<mosaic_0001>
module attributes {stable_mosaic.version = 11 : i64} {
  func.func @_add_pe_kernel(%arg0: i32, %arg1: memref<8x2x32xf32, #tpu.memory_space<vmem>>, %arg2: memref<8x32xf32, #tpu.memory_space<vmem>>, %arg3: memref<8x2x32xf32, #tpu.memory_space<vmem>>) attributes {dimension_semantics = [#tpu.dimension_semantics<parallel>], iteration_bounds = array<i64: 1>, scalar_prefetch = 0 : i64, scratch_operands = 0 : i64, tpu.core_type = #tpu.core_type<tc>, window_params = [{transform_indices = @transform_0, window_bounds = array<i64: 8, 2, 32>}, {transform_indices = @transform_1, window_bounds = array<i64: 8, 32>}, {transform_indices = @transform_2, window_bounds = array<i64: 8, 2, 32>}]} {
    %c0 = arith.constant 0 : index
    %c0_0 = arith.constant 0 : index
    %c0_1 = arith.constant 0 : index
    %0 = vector.load %arg1[%c0, %c0_0, %c0_1] : memref<8x2x32xf32, #tpu.memory_space<vmem>>, vector<8x2x32xf32>
    %c0_2 = arith.constant 0 : index
    %c0_3 = arith.constant 0 : index
    %1 = vector.load %arg2[%c0_2, %c0_3] : memref<8x32xf32, #tpu.memory_space<vmem>>, vector<8x32xf32>
    %2 = vector.shape_cast %1 : vector<8x32xf32> to vector<8x1x32xf32>
    %3 = vector.broadcast %2 : vector<8x1x32xf32> to vector<8x2x32xf32>
    %4 = arith.addf %0, %3 : vector<8x2x32xf32>
    %c0_4 = arith.constant 0 : index
    %c0_5 = arith.constant 0 : index
    %c0_6 = arith.constant 0 : index
    %5 = vector.load %arg3[%c0_4, %c0_5, %c0_6] : memref<8x2x32xf32, #tpu.memory_space<vmem>>, vector<8x2x32xf32>
    tpu.vector_store %arg3[%c0_4, %c0_5, %c0_6], %4 {strides = array<i32>} : memref<8x2x32xf32, #tpu.memory_space<vmem>>, vector<8x2x32xf32>,
    return
  }
  func.func @transform_0(%arg0: i32) -> (i32, i32, i32) {
    %c0_i32 = arith.constant 0 : i32
    %c0_i32_0 = arith.constant 0 : i32
    %c0_i32_1 = arith.constant 0 : i32
    return %arg0, %c0_i32, %c0_i32_0 : i32, i32, i32
  }
  func.func @transform_1(%arg0: i32) -> (i32, i32) {
    %c0_i32 = arith.constant 0 : i32
    %c0_i32_0 = arith.constant 0 : i32
    return %arg0, %c0_i32 : i32, i32
  }
  func.func @transform_2(%arg0: i32) -> (i32, i32, i32) {
    %c0_i32 = arith.constant 0 : i32
    %c0_i32_0 = arith.constant 0 : i32
    %c0_i32_1 = arith.constant 0 : i32
    return %arg0, %c0_i32, %c0_i32_0 : i32, i32, i32
  }
}

</mosaic_0001>

<llo_original>
// kernel: tpu_custom_call.1
$region0: #{tpu_custom_call.1}
  #allocation0 [shape = 'u32[]', space=smem, size = 0x4, offset = 0x4, fixed_abs, tag = 'smem constant byte address 0x4 - core index']
  #allocation1 [shape = 'u32[72,128]{1,0:T(1,128)}', space=vmem, size = 0x9000, scoped, tag = 'internal scratch']
  %s0 = inlined_call_operand.hbm [shape: f32[8,2,32], index: 0, kind: input, shape index: {}]
  %s1 = inlined_call_operand.hbm [shape: f32[8,32], index: 1, kind: input, shape index: {}]
  %s2 = inlined_call_operand.hbm [shape: f32[8,2,32], index: 2, kind: output, shape index: {}]
  %s3 = sld [smem:[#allocation0]]
  $region26: #{tpu_custom_call.1} parent=0
    _
  %s5 = ssub.s32 1, %s3
  %s6 = scalar_select 0, %s5, %s3
  $region1: #{tpu_custom_call.1} parent=0
    #allocation2 [shape = 'u8[8192]{0}', space=vmem, size = 0x2000, scoped, tag = 'input window, operand 0, single buffered']
    #allocation3 [shape = 's32[1]{0}', space=sflag, size = 0x4, scoped, tag = 'scoped memory for tpu_custom_call.1']
    #allocation4 [shape = 's32[1]{0}', space=sflag, size = 0x4, scoped, tag = 'scoped memory for tpu_custom_call.1']
    #allocation5 [shape = 'u8[4096]{0}', space=vmem, size = 0x1000, scoped, tag = 'input window, operand 1, single buffered']
    #allocation6 [shape = 's32[1]{0}', space=sflag, size = 0x4, scoped, tag = 'scoped memory for tpu_custom_call.1']
    #allocation7 [shape = 'u8[8192]{0}', space=vmem, size = 0x2000, scoped, tag = 'output window, operand 0, single buffered']
    %7 = vsyncpa [#allocation3], 0
    %8 = vsyncpa [#allocation6], 0
    %9 = vsyncpa [#allocation4], 0
    // Predicated region
    $region2: #{tpu_custom_call.1} parent=1 // pred_check
      _
    $region3: #{tpu_custom_call.1} parent=1 // pred_check_branch
      %11 = sbr.rel (0) target = $region5
    $region4: #{tpu_custom_call.1} parent=1 // pred_region
      %13 = vsyncadd [#allocation3], 0
      %s14 = sshll.u32 %s0, 4
      %s15 = int_to_ptr.hbm [resolvable:$true] %s14
      %s16 = sshll.u32 [#allocation2], 4
      %s17 = int_to_ptr.vmem [resolvable:$true] %s16
      %22 = dma.hbm_to_vmem [thread:$0]  %s15, 256, %s17, [#allocation3], 32, 32, 2
    $region5: #{tpu_custom_call.1} parent=1 // pred_fallthru
      _
    // Predicated region
    $region6: #{tpu_custom_call.1} parent=1 // pred_check
      _
    $region7: #{tpu_custom_call.1} parent=1 // pred_check_branch
      %24 = sbr.rel (0) target = $region9
    $region8: #{tpu_custom_call.1} parent=1 // pred_region
      %26 = vsyncadd [#allocation6], 0
      %s28 = sshll.u32 %s1, 4
      %s29 = int_to_ptr.hbm [resolvable:$true] %s28
      %s30 = sshll.u32 [#allocation5], 4
      %s31 = int_to_ptr.vmem [resolvable:$true] %s30
      %33 = dma.hbm_to_vmem [thread:$0]  %s29, 128, %s31, [#allocation6]
    $region9: #{tpu_custom_call.1} parent=1 // pred_fallthru
      _
    // Predicated region
    $region10: #{tpu_custom_call.1} parent=1 // pred_check
      _
    $region11: #{tpu_custom_call.1} parent=1 // pred_check_branch
      %35 = sbr.rel (0) target = $region13
    $region12: #{tpu_custom_call.1} parent=1 // pred_region
      %37 = dma.done [#allocation3], 256
    $region13: #{tpu_custom_call.1} parent=1 // pred_fallthru
      _
    // Predicated region
    $region14: #{tpu_custom_call.1} parent=1 // pred_check
      _
    $region15: #{tpu_custom_call.1} parent=1 // pred_check_branch
      %39 = sbr.rel (0) target = $region17
    $region16: #{tpu_custom_call.1} parent=1 // pred_region
      %41 = dma.done [#allocation6], 128
    $region17: #{tpu_custom_call.1} parent=1 // pred_fallthru
      _
    %v42 = vld [vmem:[#allocation2] sm:$0x3]
    %v43 = vld [vmem:[#allocation2 + $0x2] sm:$0x3]
    %v44 = vld [vmem:[#allocation2 + $0x4] sm:$0x3]
    %v45 = vld [vmem:[#allocation2 + $0x6] sm:$0x3]
    %v46 = vld [vmem:[#allocation2 + $0x8] sm:$0x3]
    %v47 = vld [vmem:[#allocation2 + $0xa] sm:$0x3]
    %v48 = vld [vmem:[#allocation2 + $0xc] sm:$0x3]
    %v49 = vld [vmem:[#allocation2 + $0xe] sm:$0x3]
    %v50 = vld [vmem:[#allocation5] sm:$0xff]
    %v52 = vrot.slane %v50, 1
    %v53 = vrot.slane %v50, 2
    %v54 = vrot.slane %v50, 3
    %v55 = vrot.slane %v50, 4
    %v56 = vrot.slane %v50, 5
    %v57 = vrot.slane %v50, 6
    %v58 = vrot.slane %v50, 7
    %v59 = vperm.slane %v50, 0
    %v60 = vperm.slane %v52, 0
    %v61 = vperm.slane %v53, 0
    %v62 = vperm.slane %v54, 0
    %v63 = vperm.slane %v55, 0
    %v64 = vperm.slane %v56, 0
    %v65 = vperm.slane %v57, 0
    %v66 = vperm.slane %v58, 0
    %v75 = vadd.f32 %v42, %v59
    %v76 = vadd.f32 %v43, %v60
    %v77 = vadd.f32 %v44, %v61
    %v78 = vadd.f32 %v45, %v62
    %v79 = vadd.f32 %v46, %v63
    %v80 = vadd.f32 %v47, %v64
    %v81 = vadd.f32 %v48, %v65
    %v82 = vadd.f32 %v49, %v66
    %vm83 = vcmask 254976
    %84 = vst.msk [vmem:[#allocation7] sm:$0x3] %vm83, %v75
    %85 = vst.msk [vmem:[#allocation7 + $0x2] sm:$0x3] %vm83, %v76
    %86 = vst.msk [vmem:[#allocation7 + $0x4] sm:$0x3] %vm83, %v77
    %87 = vst.msk [vmem:[#allocation7 + $0x6] sm:$0x3] %vm83, %v78
    %88 = vst.msk [vmem:[#allocation7 + $0x8] sm:$0x3] %vm83, %v79
    %89 = vst.msk [vmem:[#allocation7 + $0xa] sm:$0x3] %vm83, %v80
    %90 = vst.msk [vmem:[#allocation7 + $0xc] sm:$0x3] %vm83, %v81
    %91 = vst.msk [vmem:[#allocation7 + $0xe] sm:$0x3] %vm83, %v82
    // Predicated region
    $region18: #{tpu_custom_call.1} parent=1 // pred_check
      _
    $region19: #{tpu_custom_call.1} parent=1 // pred_check_branch
      %93 = sbr.rel (0) target = $region21
    $region20: #{tpu_custom_call.1} parent=1 // pred_region
      %95 = vsyncadd [#allocation4], 0
      %s96 = sshll.u32 [#allocation7], 4
      %s97 = int_to_ptr.vmem [resolvable:$true] %s96
      %s98 = sshll.u32 %s2, 4
      %s99 = int_to_ptr.hbm [resolvable:$true] %s98
      %104 = dma.vmem_to_hbm [thread:$0]  %s97, 256, %s99, [#allocation4], 32, 32, 2
    $region21: #{tpu_custom_call.1} parent=1 // pred_fallthru
      _
    // Predicated region
    $region22: #{tpu_custom_call.1} parent=1 // pred_check
      _
    $region23: #{tpu_custom_call.1} parent=1 // pred_check_branch
      %106 = sbr.rel (0) target = $region25
    $region24: #{tpu_custom_call.1} parent=1 // pred_region
      %108 = dma.done [#allocation4], 256
    $region25: #{tpu_custom_call.1} parent=1 // pred_fallthru
      _
    %109 = vsyncpa [#allocation3], 1
    %110 = vsyncpa [#allocation6], 1
    %111 = vsyncpa [#allocation4], 1

</llo_original>
